<compile_context>
chip_gen: v5e
topology: v5e:2x2
jax: 0.10.0
libtpu: 0.0.40
codegen_flags: <defaults>
</compile_context>

<pallas_src>
import functools

import jax
import jax.numpy as jnp
from jax import lax
from jax.experimental import pallas as pl
from jax.experimental.pallas import tpu as pltpu


def _round_up(x, m):
    return ((x + m - 1) // m) * m


def _vmem_budget_and_limit():
    """Generation-aware (budget for kernel buffers, scoped-VMEM limit)."""
    try:
        cap = int(pltpu.get_tpu_info().vmem_capacity_bytes)
    except Exception:
        cap = 64 << 20  # conservative (v7x-sized) fallback
    budget = min(cap * 3 // 8, 48 << 20)   # 48 MiB on v5e/v6e, 24 MiB on v7x
    limit = min(cap * 3 // 4, 96 << 20)    # raise Mosaic's scoped limit, keep headroom
    return budget, limit


def _choose_tiles(B, C, HW, in_itemsize, out_itemsize, vmem_budget):
    """Pick (tile_b, tile_c, tile_hw); all partial blocks are allowed."""
    sub = max(8, 32 // in_itemsize)        # sublane packing: 8 / 16 / 32 (f32/bf16/int8)
    hw128 = _round_up(max(HW, 1), 128)
    target_hw = min(hw128, 512)            # keep DMA rows >= 512 lanes when possible
    max_in_block = 4 << 20                 # soft cap: ~4 MiB per input block per step

    def hw_cap(tb, tc):
        tc_pad = _round_up(tc, sub)
        per_lane_in = tb * tc_pad * in_itemsize               # one input block, per lane
        # 2 inputs x 2 pipeline buffers + output x2 buffers + 3 f32 accumulators
        per_lane_all = 4 * per_lane_in + tb * (2 * out_itemsize + 3 * 4)
        cap = min(hw128, vmem_budget // per_lane_all, max_in_block // per_lane_in)
        return (cap // 128) * 128

    tile_b, tile_c = B, C
    # (1) shrink the batch tile (multiples of 8) while a full-C block can't
    #     reach the target lane width under the budget
    while tile_b > 8 and hw_cap(tile_b, tile_c) < target_hw:
        tile_b = max(8, _round_up(tile_b // 2, 8))
    # (2) then chunk the channel axis (accumulator path)
    while _round_up(tile_c, sub) > sub and hw_cap(tile_b, tile_c) < target_hw:
        tile_c = max(sub, _round_up(_round_up(tile_c, sub) // 2, sub))
    tile_hw = max(128, hw_cap(tile_b, tile_c))

    # Keep >=2 parallel grid steps when the whole problem would otherwise be a
    # single step, so a 2-TensorCore part (v7x) gets both cores busy; on 1-TC
    # parts this costs one extra ~0.35us grid step (negligible).
    if pl.cdiv(B, tile_b) == 1 and pl.cdiv(HW, tile_hw) == 1 and hw128 >= 256:
        tile_hw = max(128, ((tile_hw // 2) // 128) * 128)

    return tile_b, tile_c, tile_hw


def _finalize_sim(ss1, ss2, dot, eps):
    # max(sqrt(ss), eps) == sqrt(max(ss, eps^2)); rsqrt uses the EUP slot.
    eps2 = jnp.float32(eps) * jnp.float32(eps)
    inv1 = lax.rsqrt(jnp.maximum(ss1, eps2))
    inv2 = lax.rsqrt(jnp.maximum(ss2, eps2))
    return 1.0 - dot * inv1 * inv2


def _cosine_distance_kernel(x1_ref, x2_ref, o_ref, *, eps):
    # Single-pass path (whole C fits in one block).
    x1 = x1_ref[...].astype(jnp.float32)
    x2 = x2_ref[...].astype(jnp.float32)
    ss1 = jnp.sum(x1 * x1, axis=1)          # (tile_b, tile_hw)
    ss2 = jnp.sum(x2 * x2, axis=1)
    dot = jnp.sum(x1 * x2, axis=1)
    o_ref[...] = _finalize_sim(ss1, ss2, dot, eps).astype(o_ref.dtype)


def _cosine_distance_chunked_kernel(x1_ref, x2_ref, o_ref,
                                    ss1_ref, ss2_ref, dot_ref, *,
                                    eps, c_total, c_chunk):
    # Channel-chunked path: grid axis 2 iterates C chunks ('arbitrary'),
    # accumulators live in VMEM scratch, epilogue on the last chunk.
    c = pl.program_id(2)

    @pl.when(c == 0)
    def _():
        ss1_ref[...] = jnp.zeros_like(ss1_ref)
        ss2_ref[...] = jnp.zeros_like(ss2_ref)
        dot_ref[...] = jnp.zeros_like(dot_ref)

    x1 = x1_ref[...].astype(jnp.float32)
    x2 = x2_ref[...].astype(jnp.float32)

    if c_total % c_chunk != 0:
        # Zero out channels past C so garbage rows of the partial final C chunk
        # never enter the reduction.  Statically skipped when C % tile_c == 0.
        ch = c * c_chunk + lax.broadcasted_iota(jnp.int32, x1.shape, 1)
        valid = ch < c_total
        x1 = jnp.where(valid, x1, 0.0)
        x2 = jnp.where(valid, x2, 0.0)

    ss1_ref[...] += jnp.sum(x1 * x1, axis=1)
    ss2_ref[...] += jnp.sum(x2 * x2, axis=1)
    dot_ref[...] += jnp.sum(x1 * x2, axis=1)

    @pl.when(c == pl.num_programs(2) - 1)
    def _():
        o_ref[...] = _finalize_sim(ss1_ref[...], ss2_ref[...], dot_ref[...],
                                   eps).astype(o_ref.dtype)


def cosine_distance(x1, x2, *, dim=1, eps=1e-8, _tiles=None):
    """1 - cosine_similarity(x1, x2, dim=1, eps) for (B, C, *spatial) inputs."""
    assert dim == 1, "kernel implements the module default dim=1 (channel axis)"
    assert x1.shape == x2.shape and x1.ndim >= 2
    B, C = x1.shape[0], x1.shape[1]
    spatial = x1.shape[2:]
    HW = 1
    for s in spatial:
        HW *= int(s)

    budget, vmem_limit = _vmem_budget_and_limit()
    in_itemsize = jnp.dtype(x1.dtype).itemsize
    out_dtype = x1.dtype
    out_itemsize = jnp.dtype(out_dtype).itemsize

    if _tiles is not None:
        tile_b, tile_c, tile_hw = _tiles
    else:
        tile_b, tile_c, tile_hw = _choose_tiles(B, C, HW, in_itemsize,
                                                out_itemsize, budget)

    x1r = x1.reshape(B, C, HW)
    x2r = x2.reshape(B, C, HW)

    gh = pl.cdiv(HW, tile_hw)
    gb = pl.cdiv(B, tile_b)
    gc = pl.cdiv(C, tile_c)

    if gc == 1:
        tile_c = C  # full channel axis per block
        kernel = functools.partial(_cosine_distance_kernel, eps=eps)
        grid = (gh, gb)
        in_spec = pl.BlockSpec((tile_b, tile_c, tile_hw), lambda h, b: (b, 0, h))
        out_spec = pl.BlockSpec((tile_b, tile_hw), lambda h, b: (b, h))
        scratch = []
        dims = ("parallel", "parallel")
    else:
        kernel = functools.partial(_cosine_distance_chunked_kernel, eps=eps,
                                   c_total=C, c_chunk=tile_c)
        grid = (gh, gb, gc)   # reduction (C) axis last
        in_spec = pl.BlockSpec((tile_b, tile_c, tile_hw), lambda h, b, c: (b, c, h))
        out_spec = pl.BlockSpec((tile_b, tile_hw), lambda h, b, c: (b, h))
        scratch = [pltpu.VMEM((tile_b, tile_hw), jnp.float32)] * 3
        dims = ("parallel", "parallel", "arbitrary")

    out = pl.pallas_call(
        kernel,
        out_shape=jax.ShapeDtypeStruct((B, HW), out_dtype),
        grid=grid,
        in_specs=[in_spec, in_spec],
        out_specs=out_spec,
        scratch_shapes=scratch,
        compiler_params=pltpu.CompilerParams(
            dimension_semantics=dims,
            vmem_limit_bytes=vmem_limit),
    )(x1r, x2r)

    return out.reshape((B,) + tuple(spatial))


def _reference(x1, x2, eps=1e-8):
    # PyTorch-style (per-norm eps clamp): clamp each L2 norm, normalize, dot.
    x1 = x1.astype(jnp.float32)
    x2 = x2.astype(jnp.float32)
    n1 = jnp.maximum(jnp.sqrt(jnp.sum(x1 * x1, axis=1, keepdims=True)), eps)
    n2 = jnp.maximum(jnp.sqrt(jnp.sum(x2 * x2, axis=1, keepdims=True)), eps)
    return 1.0 - jnp.sum((x1 / n1) * (x2 / n2), axis=1)


if __name__ == "__main__":
    key = jax.random.PRNGKey(0)
    k1, k2, k3, k4, k5, k6 = jax.random.split(key, 6)

    # Primary shape from the module spec: NCHW, reduction over channels.
    B, C, H, W = 2, 4, 16, 16
    x1 = jax.random.normal(k1, (B, C, H, W), dtype=jnp.float32)
    x2 = jax.random.normal(k2, (B, C, H, W), dtype=jnp.float32)
    out = cosine_distance(x1, x2)
    jax.block_until_ready(out)
    assert out.shape == (B, H, W)
    assert jnp.allclose(out, _reference(x1, x2), atol=1e-5, rtol=1e-5)

    # Non-128-multiple spatial size and C not a multiple of 8: exercises the
    # no-padding partial-block path (masked writeback of OOB lanes).
    y1 = jax.random.normal(k3, (2, 5, 10, 10), dtype=jnp.float32)
    y2 = jax.random.normal(k4, (2, 5, 10, 10), dtype=jnp.float32)
    out2 = cosine_distance(y1, y2)
    jax.block_until_ready(out2)
    assert out2.shape == (2, 10, 10)
    assert jnp.allclose(out2, _reference(y1, y2), atol=1e-5, rtol=1e-5)

    # Force the channel-chunked accumulator path (with a partial final C chunk)
    # at a small size to validate the large-C code path.
    z1 = jax.random.normal(k5, (2, 20, 10, 10), dtype=jnp.float32)
    z2 = jax.random.normal(k6, (2, 20, 10, 10), dtype=jnp.float32)
    out3 = cosine_distance(z1, z2, _tiles=(2, 8, 128))
    jax.block_until_ready(out3)
    assert jnp.allclose(out3, _reference(z1, z2), atol=1e-5, rtol=1e-5)

    print("KERNEL_OK")
</pallas_src>

<mosaic_0001>
module attributes {stable_mosaic.version = 11 : i64} {
  func.func @_cosine_distance_kernel(%arg0: i32, %arg1: i32, %arg2: memref<2x4x128xf32, #tpu.memory_space<vmem>>, %arg3: memref<2x4x128xf32, #tpu.memory_space<vmem>>, %arg4: memref<2x128xf32, #tpu.memory_space<vmem>>) attributes {dimension_semantics = [#tpu.dimension_semantics<parallel>, #tpu.dimension_semantics<parallel>], iteration_bounds = array<i64: 2, 1>, scalar_prefetch = 0 : i64, scratch_operands = 0 : i64, tpu.core_type = #tpu.core_type<tc>, window_params = [{transform_indices = @transform_0, window_bounds = array<i64: 2, 4, 128>}, {transform_indices = @transform_1, window_bounds = array<i64: 2, 4, 128>}, {transform_indices = @transform_2, window_bounds = array<i64: 2, 128>}]} {
    %c0 = arith.constant 0 : index
    %c0_0 = arith.constant 0 : index
    %c0_1 = arith.constant 0 : index
    %0 = vector.load %arg2[%c0, %c0_0, %c0_1] : memref<2x4x128xf32, #tpu.memory_space<vmem>>, vector<2x4x128xf32>
    %c0_2 = arith.constant 0 : index
    %c0_3 = arith.constant 0 : index
    %c0_4 = arith.constant 0 : index
    %1 = vector.load %arg3[%c0_2, %c0_3, %c0_4] : memref<2x4x128xf32, #tpu.memory_space<vmem>>, vector<2x4x128xf32>
    %2 = arith.mulf %0, %0 : vector<2x4x128xf32>
    %cst = arith.constant dense<0.000000e+00> : vector<2x128xf32>
    %3 = vector.multi_reduction <add>, %2, %cst [1] : vector<2x4x128xf32> to vector<2x128xf32>
    %4 = arith.mulf %1, %1 : vector<2x4x128xf32>
    %cst_5 = arith.constant dense<0.000000e+00> : vector<2x128xf32>
    %5 = vector.multi_reduction <add>, %4, %cst_5 [1] : vector<2x4x128xf32> to vector<2x128xf32>
    %6 = arith.mulf %0, %1 : vector<2x4x128xf32>
    %cst_6 = arith.constant dense<0.000000e+00> : vector<2x128xf32>
    %7 = vector.multi_reduction <add>, %6, %cst_6 [1] : vector<2x4x128xf32> to vector<2x128xf32>
    %cst_7 = arith.constant 9.99999993E-9 : f32
    %cst_8 = arith.constant 9.99999993E-9 : f32
    %8 = arith.mulf %cst_7, %cst_8 : f32
    %9 = vector.broadcast %8 : f32 to vector<2x128xf32>
    %10 = arith.maximumf %3, %9 : vector<2x128xf32>
    %11 = math.rsqrt %10 : vector<2x128xf32>
    %12 = vector.broadcast %8 : f32 to vector<2x128xf32>
    %13 = arith.maximumf %5, %12 : vector<2x128xf32>
    %14 = math.rsqrt %13 : vector<2x128xf32>
    %15 = arith.mulf %7, %11 : vector<2x128xf32>
    %16 = arith.mulf %15, %14 : vector<2x128xf32>
    %cst_9 = arith.constant 1.000000e+00 : f32
    %17 = vector.broadcast %cst_9 : f32 to vector<2x128xf32>
    %18 = arith.subf %17, %16 : vector<2x128xf32>
    %c0_10 = arith.constant 0 : index
    %c0_11 = arith.constant 0 : index
    %19 = vector.load %arg4[%c0_10, %c0_11] : memref<2x128xf32, #tpu.memory_space<vmem>>, vector<2x128xf32>
    tpu.vector_store %arg4[%c0_10, %c0_11], %18 {strides = array<i32>} : memref<2x128xf32, #tpu.memory_space<vmem>>, vector<2x128xf32>,
    return
  }
  func.func @transform_0(%arg0: i32, %arg1: i32) -> (i32, i32, i32) {
    %c0_i32 = arith.constant 0 : i32
    %c0_i32_0 = arith.constant 0 : i32
    return %arg1, %c0_i32, %arg0 : i32, i32, i32
  }
  func.func @transform_1(%arg0: i32, %arg1: i32) -> (i32, i32, i32) {
    %c0_i32 = arith.constant 0 : i32
    %c0_i32_0 = arith.constant 0 : i32
    return %arg1, %c0_i32, %arg0 : i32, i32, i32
  }
  func.func @transform_2(%arg0: i32, %arg1: i32) -> (i32, i32) {
    %c0_i32 = arith.constant 0 : i32
    return %arg1, %arg0 : i32, i32
  }
}

</mosaic_0001>

<llo_original>
// kernel: tpu_custom_call.1
$region0: #{tpu_custom_call.1}
  #allocation0 [shape = 'u32[]', space=smem, size = 0x4, offset = 0x4, fixed_abs, tag = 'smem constant byte address 0x4 - core index']
  #allocation1 [shape = 'u32[72,128]{1,0:T(1,128)}', space=vmem, size = 0x9000, scoped, tag = 'internal scratch']
  %s0 = inlined_call_operand.hbm [shape: f32[2,4,256], index: 0, kind: input, shape index: {}]
  %s1 = inlined_call_operand.hbm [shape: f32[2,4,256], index: 1, kind: input, shape index: {}]
  %s2 = inlined_call_operand.hbm [shape: f32[2,256], index: 2, kind: output, shape index: {}]
  %s3 = sld [smem:[#allocation0]]
  $region49: #{tpu_custom_call.1} parent=0
    _
  %s5 = ssub.s32 1, %s3
  %s6 = scalar_select 0, %s5, %s3
  $region1: #{tpu_custom_call.1} parent=0
    #allocation2 [shape = 'u8[8192]{0}', space=vmem, size = 0x2000, scoped, tag = 'input window, operand 0']
    #allocation3 [shape = 's32[2]{0}', space=sflag, size = 0x8, scoped, tag = 'scoped memory for tpu_custom_call.1']
    #allocation4 [shape = 's32[2]{0}', space=sflag, size = 0x8, scoped, tag = 'scoped memory for tpu_custom_call.1']
    #allocation5 [shape = 'u8[8192]{0}', space=vmem, size = 0x2000, scoped, tag = 'input window, operand 1']
    #allocation6 [shape = 's32[2]{0}', space=sflag, size = 0x8, scoped, tag = 'scoped memory for tpu_custom_call.1']
    #allocation7 [shape = 'u8[2048]{0}', space=vmem, size = 0x800, scoped, tag = 'output window, operand 0']
    %7 = vsyncpa [#allocation3], 0
    %s8 = scalar_lea.sflag [#allocation3], 1
    %9 = vsyncpa %s8, 0
    %10 = vsyncpa [#allocation6], 0
    %s11 = scalar_lea.sflag [#allocation6], 1
    %12 = vsyncpa %s11, 0
    %13 = vsyncpa [#allocation4], 0
    %s14 = scalar_lea.sflag [#allocation4], 1
    %15 = vsyncpa %s14, 0
    loop: start=0, step=1, limit=4
    $region2: #{tpu_custom_call.1} parent=1 // loop_pre_header
      _
    $region3: #{tpu_custom_call.1} parent=1 // loop_header
      %s17 = sphi 0, %s21
      %p18 = scmp.ge.s32.totalorder %s17, 4
      %s24 = sphi 0, %s36
      %s25 = sphi 0, %s32
      %s26 = sphi 0, %s24
      %s27 = sphi 0, %s25
      %s28 = sphi 0, %s26
      %s29 = sphi 0, %s27
      %s41 = sphi 0, %s43
      %s44 = sphi 0, %s41
      %s45 = sphi 0, %s44
      %s61 = sphi 0, %s45
      %s69 = sphi 0, %s71
      %s72 = sphi 0, %s69
      %s73 = sphi 0, %s72
      %s89 = sphi 0, %s73
      %s97 = sphi 0, %s99
      %s100 = sphi 0, %s97
      %s101 = sphi 0, %s100
      %s117 = sphi 0, %s101
    $region4: #{tpu_custom_call.1} parent=1 // loop_header_branch
      %20 = sbr.rel (%p18) target = $region8
    $region5: #{tpu_custom_call.1} parent=1 // loop_body
      %s22 = ssub.s32 %s17, 1
      %s23 = ssub.s32 %s17, 2
      %s30 = sadd.s32 1, %s25
      %p31 = scmp.ge.s32.totalorder %s30, 1
      %s32 = scalar_select %p31, 0, %s30
      %s33 = sadd.s32 1, %s24
      %s34 = scalar_select %p31, %s33, %s24
      %p35 = scmp.ge.s32.totalorder %s34, 2
      %s36 = scalar_select %p35, 0, %s34
      %s37 = ssub.s32 %s25, %s32
      %s38 = ssub.s32 %s24, %s36
      %s39 = sor.u32 %s37, %s38
      %p40 = scmp.eq.s32.totalorder %s39, 0
      %s42 = sadd.s32 %s41, 1
      %s43 = scalar_select %p40, %s41, %s42
      %p46 = pneg %p40
      %p47 = scmp.eq.s32.totalorder %s17, 1
      %p48 = por %p46, %p47
      %p49 = scmp.ne.s32.totalorder %s41, %s44
      %p50 = scmp.eq.s32.totalorder %s17, 0
      %p51 = por %p49, %p50
      %p52 = scmp.ne.s32.totalorder %s41, %s44
      %p53 = scmp.eq.s32.totalorder %s22, 1
      %p54 = por %p52, %p53
      %p55 = scmp.ne.s32.totalorder %s44, %s45
      %p56 = scmp.eq.s32.totalorder %s22, 0
      %p57 = por %p55, %p56
      %p58 = scmp.ne.s32.totalorder %s44, %s45
      %p59 = scmp.eq.s32.totalorder %s23, 1
      %p60 = por %p58, %p59
      %p62 = scmp.ne.s32.totalorder %s45, %s61
      %p63 = scmp.eq.s32.totalorder %s23, 0
      %p64 = por %p62, %p63
      %s65 = ssub.s32 %s25, %s32
      %s66 = ssub.s32 %s24, %s36
      %s67 = sor.u32 %s65, %s66
      %p68 = scmp.eq.s32.totalorder %s67, 0
      %s70 = sadd.s32 %s69, 1
      %s71 = scalar_select %p68, %s69, %s70
      %p74 = pneg %p68
      %p75 = scmp.eq.s32.totalorder %s17, 1
      %p76 = por %p74, %p75
      %p77 = scmp.ne.s32.totalorder %s69, %s72
      %p78 = scmp.eq.s32.totalorder %s17, 0
      %p79 = por %p77, %p78
      %p80 = scmp.ne.s32.totalorder %s69, %s72
      %p81 = scmp.eq.s32.totalorder %s22, 1
      %p82 = por %p80, %p81
      %p83 = scmp.ne.s32.totalorder %s72, %s73
      %p84 = scmp.eq.s32.totalorder %s22, 0
      %p85 = por %p83, %p84
      %p86 = scmp.ne.s32.totalorder %s72, %s73
      %p87 = scmp.eq.s32.totalorder %s23, 1
      %p88 = por %p86, %p87
      %p90 = scmp.ne.s32.totalorder %s73, %s89
      %p91 = scmp.eq.s32.totalorder %s23, 0
      %p92 = por %p90, %p91
      %s93 = ssub.s32 %s25, %s32
      %s94 = ssub.s32 %s24, %s36
      %s95 = sor.u32 %s93, %s94
      %p96 = scmp.eq.s32.totalorder %s95, 0
      %s98 = sadd.s32 %s97, 1
      %s99 = scalar_select %p96, %s97, %s98
      %p102 = pneg %p96
      %p103 = scmp.eq.s32.totalorder %s17, 1
      %p104 = por %p102, %p103
      %p105 = scmp.ne.s32.totalorder %s97, %s100
      %p106 = scmp.eq.s32.totalorder %s17, 0
      %p107 = por %p105, %p106
      %p108 = scmp.ne.s32.totalorder %s97, %s100
      %p109 = scmp.eq.s32.totalorder %s22, 1
      %p110 = por %p108, %p109
      %p111 = scmp.ne.s32.totalorder %s100, %s101
      %p112 = scmp.eq.s32.totalorder %s22, 0
      %p113 = por %p111, %p112
      %p114 = scmp.ne.s32.totalorder %s100, %s101
      %p115 = scmp.eq.s32.totalorder %s23, 1
      %p116 = por %p114, %p115
      %p118 = scmp.ne.s32.totalorder %s101, %s117
      %p119 = scmp.eq.s32.totalorder %s23, 0
      %p120 = por %p118, %p119
      %p121 = scmp.le.s32.totalorder 1, %s17
      %p122 = scmp.lt.s32.totalorder %s17, 3
      %p123 = pnand %p121, %p122
      %p124 = pneg %p123
      // Predicated region
      $region9: #{tpu_custom_call.1} parent=5 // pred_check
        _
      $region10: #{tpu_custom_call.1} parent=5 // pred_check_branch
        %126 = sbr.rel (%p123) target = $region12
      $region11: #{tpu_custom_call.1} parent=5 // pred_region
        %s127 = ssub.s32 %s17, 1
      $region12: #{tpu_custom_call.1} parent=5 // pred_fallthru
        _
      %p128 = scmp.lt.s32.totalorder %s17, 2
      // Predicated region
      $region13: #{tpu_custom_call.1} parent=5 // pred_check
        %p129 = pneg %p128
      $region14: #{tpu_custom_call.1} parent=5 // pred_check_branch
        %131 = sbr.rel (%p129) target = $region16
      $region15: #{tpu_custom_call.1} parent=5 // pred_region
        // Predicated region
        $region17: #{tpu_custom_call.1} parent=15 // pred_check
          %p132 = pneg %p51
        $region18: #{tpu_custom_call.1} parent=15 // pred_check_branch
          %134 = sbr.rel (%p132) target = $region20
        $region19: #{tpu_custom_call.1} parent=15 // pred_region
          %s135 = sand.u32 %s41, 1
          %s136 = scalar_lea.sflag [#allocation3], %s135
          %s137 = sand.u32 %s41, 1
          %s138 = smul.addr %s137, 8
          %s139 = scalar_lea.vmem [#allocation2], %s138
          %s140 = smul.u32 2, %s25
          %142 = vsyncadd %s136, 0
          %s143 = smul.addr %s140, 2
          %s144 = sadd.s32 %s24, %s143
          %s145 = smul.addr %s144, 4
          %s146 = scalar_lea.hbm %s0, %s145
          %s147 = sshll.u32 %s146, 4
          %s148 = int_to_ptr.hbm [resolvable:$true] %s147
          %s149 = sshll.u32 %s139, 4
          %s150 = int_to_ptr.vmem [resolvable:$true] %s149
          %155 = dma.hbm_to_vmem [thread:$0]  %s148, 128, %s150, %s136, 128, 64, 4
        $region20: #{tpu_custom_call.1} parent=15 // pred_fallthru
          _
        // Predicated region
        $region21: #{tpu_custom_call.1} parent=15 // pred_check
          %p156 = pneg %p79
        $region22: #{tpu_custom_call.1} parent=15 // pred_check_branch
          %158 = sbr.rel (%p156) target = $region24
        $region23: #{tpu_custom_call.1} parent=15 // pred_region
          %s159 = sand.u32 %s69, 1
          %s160 = scalar_lea.sflag [#allocation6], %s159
          %s161 = sand.u32 %s69, 1
          %s162 = smul.addr %s161, 8
          %s163 = scalar_lea.vmem [#allocation5], %s162
          %s164 = smul.u32 2, %s25
          %166 = vsyncadd %s160, 0
          %s167 = smul.addr %s164, 2
          %s168 = sadd.s32 %s24, %s167
          %s169 = smul.addr %s168, 4
          %s170 = scalar_lea.hbm %s1, %s169
          %s171 = sshll.u32 %s170, 4
          %s172 = int_to_ptr.hbm [resolvable:$true] %s171
          %s173 = sshll.u32 %s163, 4
          %s174 = int_to_ptr.vmem [resolvable:$true] %s173
          %179 = dma.hbm_to_vmem [thread:$0]  %s172, 128, %s174, %s160, 128, 64, 4
        $region24: #{tpu_custom_call.1} parent=15 // pred_fallthru
          _
      $region16: #{tpu_custom_call.1} parent=5 // pred_fallthru
        _
      %p180 = scmp.le.s32.totalorder 1, %s17
      %p181 = scmp.lt.s32.totalorder %s17, 3
      %p182 = pnand %p180, %p181
      %p183 = pneg %p182
      // Predicated region
      $region25: #{tpu_custom_call.1} parent=5 // pred_check
        _
      $region26: #{tpu_custom_call.1} parent=5 // pred_check_branch
        %185 = sbr.rel (%p182) target = $region28
      $region27: #{tpu_custom_call.1} parent=5 // pred_region
        %s186 = ssub.s32 %s17, 1
        %s187 = sand.u32 %s44, 1
        %s188 = scalar_lea.sflag [#allocation3], %s187
        %s189 = sand.u32 %s44, 1
        %s190 = smul.addr %s189, 8
        %s191 = scalar_lea.vmem [#allocation2], %s190
        // Predicated region
        $region29: #{tpu_custom_call.1} parent=27 // pred_check
          %p192 = pneg %p57
        $region30: #{tpu_custom_call.1} parent=27 // pred_check_branch
          %194 = sbr.rel (%p192) target = $region32
        $region31: #{tpu_custom_call.1} parent=27 // pred_region
          %196 = dma.done %s188, 128
        $region32: #{tpu_custom_call.1} parent=27 // pred_fallthru
          _
        %s197 = sand.u32 %s72, 1
        %s198 = scalar_lea.sflag [#allocation6], %s197
        %s199 = sand.u32 %s72, 1
        %s200 = smul.addr %s199, 8
        %s201 = scalar_lea.vmem [#allocation5], %s200
        // Predicated region
        $region33: #{tpu_custom_call.1} parent=27 // pred_check
          %p202 = pneg %p85
        $region34: #{tpu_custom_call.1} parent=27 // pred_check_branch
          %204 = sbr.rel (%p202) target = $region36
        $region35: #{tpu_custom_call.1} parent=27 // pred_region
          %206 = dma.done %s198, 128
        $region36: #{tpu_custom_call.1} parent=27 // pred_fallthru
          _
        %s207 = sand.u32 %s44, 1
        %s208 = scalar_lea.sflag [#allocation3], %s207
        %s209 = sand.u32 %s44, 1
        %s210 = smul.addr %s209, 8
        %s211 = scalar_lea.vmem [#allocation2], %s210
        %p212 = pneg %p57
        %p213 = pneg %p54
        %s214 = sand.u32 %s72, 1
        %s215 = scalar_lea.sflag [#allocation6], %s214
        %s216 = sand.u32 %s72, 1
        %s217 = smul.addr %s216, 8
        %s218 = scalar_lea.vmem [#allocation5], %s217
        %p219 = pneg %p85
        %p220 = pneg %p82
        %p221 = pneg %p113
        %p222 = pneg %p110
        %s223 = sand.u32 %s100, 1
        %s224 = scalar_lea.sflag [#allocation4], %s223
        %s225 = sand.u32 %s100, 1
        %s226 = smul.addr %s225, 2
        %s227 = scalar_lea.vmem [#allocation7], %s226
        %s228 = smul.u32 2, %s27
        %s229 = smul.u32 2, %s27
        %v230 = vld [vmem:[%s191] sm:$0xf]
        %v231 = vld [vmem:[%s191 + $0x4] sm:$0xf]
        %v232 = vld [vmem:[%s201] sm:$0xf]
        %v233 = vld [vmem:[%s201 + $0x4] sm:$0xf]
        %v234 = vmul.f32 %v230, %v230
        %v235 = vmul.f32 %v231, %v231
        %vm236 = vcmask 1043456
        %v237 = vsel %vm236, %v234, 0.0
        %v238 = vrot.slane %v237, 4
        %v239 = vadd.f32 %v237, %v238
        %v240 = vrot.slane %v239, 2
        %v241 = vadd.f32 %v239, %v240
        %v242 = vrot.slane %v241, 1
        %v243 = vadd.f32 %v241, %v242
        %v244 = vsel %vm236, %v235, 0.0
        %v245 = vrot.slane %v244, 4
        %v246 = vadd.f32 %v244, %v245
        %v247 = vrot.slane %v246, 2
        %v248 = vadd.f32 %v246, %v247
        %v249 = vrot.slane %v248, 1
        %v250 = vadd.f32 %v248, %v249
        %v251 = vmul.f32 %v232, %v232
        %v252 = vmul.f32 %v233, %v233
        %v253 = vsel %vm236, %v251, 0.0
        %v254 = vrot.slane %v253, 4
        %v255 = vadd.f32 %v253, %v254
        %v256 = vrot.slane %v255, 2
        %v257 = vadd.f32 %v255, %v256
        %v258 = vrot.slane %v257, 1
        %v259 = vadd.f32 %v257, %v258
        %v260 = vsel %vm236, %v252, 0.0
        %v261 = vrot.slane %v260, 4
        %v262 = vadd.f32 %v260, %v261
        %v263 = vrot.slane %v262, 2
        %v264 = vadd.f32 %v262, %v263
        %v265 = vrot.slane %v264, 1
        %v266 = vadd.f32 %v264, %v265
        %v267 = vmul.f32 %v230, %v232
        %v268 = vmul.f32 %v231, %v233
        %v269 = vsel %vm236, %v267, 0.0
        %v270 = vrot.slane %v269, 4
        %v271 = vadd.f32 %v269, %v270
        %v272 = vrot.slane %v271, 2
        %v273 = vadd.f32 %v271, %v272
        %v274 = vrot.slane %v273, 1
        %v275 = vadd.f32 %v273, %v274
        %v276 = vsel %vm236, %v268, 0.0
        %v277 = vrot.slane %v276, 4
        %v278 = vadd.f32 %v276, %v277
        %v279 = vrot.slane %v278, 2
        %v280 = vadd.f32 %v278, %v279
        %v281 = vrot.slane %v280, 1
        %v282 = vadd.f32 %v280, %v281
        %v283 = vmax.f32 %v243, 1e-16
        %v284 = vmax.f32 %v250, 1e-16
        %v285 = vrsqrt.pop %v283
        %v286 = vmul.f32 %v285, %v283
        %v287 = vmul.f32 %v286, %v285
        %v288 = vmul.f32 0.5, %v287
        %v289 = vsub.f32 1.5, %v288
        %v290 = vmul.f32 %v285, %v289
        %vm291 = vweird.f32 %v283
        %vm292 = vweird.f32 %v285
        %vm293 = vmor %vm291, %vm292
        %v294 = vsel %vm293, %v285, %v290
        %v295 = vrsqrt.pop %v284
        %v296 = vmul.f32 %v295, %v284
        %v297 = vmul.f32 %v296, %v295
        %v298 = vmul.f32 0.5, %v297
        %v299 = vsub.f32 1.5, %v298
        %v300 = vmul.f32 %v295, %v299
        %vm301 = vweird.f32 %v284
        %vm302 = vweird.f32 %v295
        %vm303 = vmor %vm301, %vm302
        %v304 = vsel %vm303, %v295, %v300
        %v305 = vmax.f32 %v259, 1e-16
        %v306 = vmax.f32 %v266, 1e-16
        %v307 = vrsqrt.pop %v305
        %v308 = vmul.f32 %v307, %v305
        %v309 = vmul.f32 %v308, %v307
        %v310 = vmul.f32 0.5, %v309
        %v311 = vsub.f32 1.5, %v310
        %v312 = vmul.f32 %v307, %v311
        %vm313 = vweird.f32 %v305
        %vm314 = vweird.f32 %v307
        %vm315 = vmor %vm313, %vm314
        %v316 = vsel %vm315, %v307, %v312
        %v317 = vrsqrt.pop %v306
        %v318 = vmul.f32 %v317, %v306
        %v319 = vmul.f32 %v318, %v317
        %v320 = vmul.f32 0.5, %v319
        %v321 = vsub.f32 1.5, %v320
        %v322 = vmul.f32 %v317, %v321
        %vm323 = vweird.f32 %v306
        %vm324 = vweird.f32 %v317
        %vm325 = vmor %vm323, %vm324
        %v326 = vsel %vm325, %v317, %v322
        %v327 = vmul.f32 %v275, %v294
        %v328 = vmul.f32 %v282, %v304
        %v329 = vmul.f32 %v327, %v316
        %v330 = vmul.f32 %v328, %v326
        %v331 = vsub.f32 1.0, %v329
        %v332 = vsub.f32 1.0, %v330
        %vm335 = vcmask 1041409
        %v336 = vsel %vm335, %v332, %v331
        %338 = vst [vmem:[%s227] sm:$0x3] %v336
        %s339 = sand.u32 %s100, 1
        %s340 = scalar_lea.sflag [#allocation4], %s339
        %s341 = sand.u32 %s100, 1
        %s342 = smul.addr %s341, 2
        %s343 = scalar_lea.vmem [#allocation7], %s342
        // Predicated region
        $region37: #{tpu_custom_call.1} parent=27 // pred_check
          %p344 = pneg %p110
        $region38: #{tpu_custom_call.1} parent=27 // pred_check_branch
          %346 = sbr.rel (%p344) target = $region40
        $region39: #{tpu_custom_call.1} parent=27 // pred_region
          %348 = vsyncadd %s340, 0
          %s349 = smul.addr %s27, 2
          %s350 = sadd.s32 %s26, %s349
          %s351 = smul.addr %s350, 2
          %s352 = scalar_lea.hbm %s2, %s351
          %s354 = sshll.u32 %s343, 4
          %s355 = int_to_ptr.vmem [resolvable:$true] %s354
          %s356 = sshll.u32 %s352, 4
          %s357 = int_to_ptr.hbm [resolvable:$true] %s356
          %359 = dma.vmem_to_hbm [thread:$0]  %s355, 32, %s357, %s340
        $region40: #{tpu_custom_call.1} parent=27 // pred_fallthru
          _
      $region28: #{tpu_custom_call.1} parent=5 // pred_fallthru
        _
      %p360 = scmp.le.s32.totalorder 2, %s17
      // Predicated region
      $region41: #{tpu_custom_call.1} parent=5 // pred_check
        %p361 = pneg %p360
      $region42: #{tpu_custom_call.1} parent=5 // pred_check_branch
        %363 = sbr.rel (%p361) target = $region44
      $region43: #{tpu_custom_call.1} parent=5 // pred_region
        %s364 = ssub.s32 %s17, 2
        // Predicated region
        $region45: #{tpu_custom_call.1} parent=43 // pred_check
          %p365 = pneg %p116
        $region46: #{tpu_custom_call.1} parent=43 // pred_check_branch
          %367 = sbr.rel (%p365) target = $region48
        $region47: #{tpu_custom_call.1} parent=43 // pred_region
          %s368 = sand.u32 %s101, 1
          %s369 = scalar_lea.sflag [#allocation4], %s368
          %s370 = sand.u32 %s101, 1
          %s371 = smul.addr %s370, 2
          %s372 = scalar_lea.vmem [#allocation7], %s371
          %374 = dma.done %s369, 32
        $region48: #{tpu_custom_call.1} parent=43 // pred_fallthru
          _
      $region44: #{tpu_custom_call.1} parent=5 // pred_fallthru
        _
    $region6: #{tpu_custom_call.1} parent=1 // loop_footer
      %s21 = sadd.s32 1, %s17
    $region7: #{tpu_custom_call.1} parent=1 // loop_footer_branch
      %16 = sbr.rel target = $region3
    $region8: #{tpu_custom_call.1} parent=1 // loop_exit
      _
    %375 = vsyncpa [#allocation3], 1
    %s376 = scalar_lea.sflag [#allocation3], 1
    %377 = vsyncpa %s376, 1
    %378 = vsyncpa [#allocation6], 1
    %s379 = scalar_lea.sflag [#allocation6], 1
    %380 = vsyncpa %s379, 1
    %381 = vsyncpa [#allocation4], 1
    %s382 = scalar_lea.sflag [#allocation4], 1
    %383 = vsyncpa %s382, 1

</llo_original>
